<compile_context>
chip_gen: v7x
topology: tpu7x:2x2x1
jax: 0.10.0
libtpu: 0.0.40
codegen_flags: <defaults>
</compile_context>

<pallas_src>
import functools

import jax
import jax.numpy as jnp
from jax.experimental import pallas as pl
from jax.experimental.pallas import tpu as pltpu


def _mlp_kernel(num_hidden, *refs):
    """One batch tile of the forward pass, batch on the lane axis.

    refs = (x, w1, b1, ..., wn, bn, wo, bo, out) with
      x  : [D_in, TILE_B]          (compute dtype: f32 or bf16)
      w_l: [H_l, H_{l-1}]  b_l: [H_l, 1]   (PyTorch [out, in] layout, as-is)
      wo : [H_n, 1]        bo : [1, 1]     (f32; last layer runs on VPU/XLU)
      out: [1, TILE_B]                     (f32, lane-dense)
    """
    x_ref, o_ref = refs[0], refs[-1]
    wo_ref, bo_ref = refs[-3], refs[-2]

    h = x_ref[...]
    for l in range(num_hidden):
        w_ref = refs[1 + 2 * l]
        b_ref = refs[2 + 2 * l]
        # MXU matmul with the PyTorch-layout weight as the stationary left
        # operand (no transpose). Cast the activation to the MXU operand dtype
        # (no-op for f32); accumulate in f32.
        h = jnp.dot(w_ref[...], h.astype(w_ref.dtype),
                    preferred_element_type=jnp.float32)
        # Bias + ReLU stay f32 on the VPU (v5e has no bf16 VPU).
        h = jnp.maximum(h + b_ref[...], 0.0)

    # Output layer (out_features == 1): VPU multiply + sublane reduce — avoids
    # an MXU pass that would use a single row/column, and the result is already
    # a lane-dense [1, TILE_B] row.
    out = jnp.sum(h * wo_ref[...], axis=0, keepdims=True) + bo_ref[...]
    o_ref[...] = out.astype(o_ref.dtype)


def option_pricing_nn(x, weights, biases, *, tile_b=128,
                      compute_dtype=jnp.float32):
    """Forward pass of OptionPricingNN.

    x       : [B, input_size] f32
    weights : list of PyTorch-layout weights W[out, in]; last has out == 1
    biases  : list of PyTorch-layout biases b[out]
    Returns [B, 1] f32.
    """
    b, d_in = x.shape
    num_hidden = len(weights) - 1
    assert weights[-1].shape[0] == 1, "last layer must have out_features == 1"

    # ---- One-time layout prep OUTSIDE pallas_call (no per-tile cost) --------
    n_tiles = -(-b // tile_b)
    b_pad = n_tiles * tile_b
    x_t = x.T                                             # [D_in, B]: batch -> lanes
    if b_pad != b:
        x_t = jnp.pad(x_t, ((0, 0), (0, b_pad - b)))      # zero-pad batch only
    x_t = x_t.astype(compute_dtype)

    resident = lambda a: pl.BlockSpec(a.shape, lambda i: (0, 0))

    args = [x_t]
    in_specs = [pl.BlockSpec((d_in, tile_b), lambda i: (0, i))]  # streamed x tiles
    for w, bias in zip(weights[:-1], biases[:-1]):
        w_c = w.astype(compute_dtype)                     # MXU operand dtype
        b_col = bias.reshape(-1, 1).astype(jnp.float32)   # [H, 1] lane-broadcast
        args += [w_c, b_col]
        in_specs += [resident(w_c), resident(b_col)]
    wo_col = weights[-1].reshape(-1, 1).astype(jnp.float32)   # [H_n, 1]
    bo_11 = biases[-1].reshape(1, 1).astype(jnp.float32)      # [1, 1]
    args += [wo_col, bo_11]
    in_specs += [resident(wo_col), resident(bo_11)]

    out = pl.pallas_call(
        functools.partial(_mlp_kernel, num_hidden),
        out_shape=jax.ShapeDtypeStruct((1, b_pad), jnp.float32),
        grid=(n_tiles,),
        in_specs=in_specs,
        out_specs=pl.BlockSpec((1, tile_b), lambda i: (0, i)),   # lane-dense row
        compiler_params=pltpu.CompilerParams(
            dimension_semantics=("parallel",)),                  # 2 TCs on v7x
    )(*args)

    # [1, B_pad] row -> [B, 1] column: same element order, so a free reshape.
    return out.reshape(b_pad, 1)[:b]


def _init_params(key, input_size, hidden_sizes):
    """Deterministic init mimicking nn.Linear (uniform +/- 1/sqrt(fan_in))."""
    sizes = [input_size] + list(hidden_sizes) + [1]
    weights, biases = [], []
    for fan_in, fan_out in zip(sizes[:-1], sizes[1:]):
        key, kw, kb = jax.random.split(key, 3)
        bound = 1.0 / float(fan_in) ** 0.5
        weights.append(jax.random.uniform(
            kw, (fan_out, fan_in), jnp.float32, -bound, bound))
        biases.append(jax.random.uniform(
            kb, (fan_out,), jnp.float32, -bound, bound))
    return weights, biases


def _reference(x, weights, biases):
    h = x
    for w, b in zip(weights[:-1], biases[:-1]):
        h = jnp.maximum(h @ w.T + b, 0.0)
    return h @ weights[-1].T + biases[-1]


if __name__ == "__main__":
    input_size = 8
    hidden_sizes = [32, 32]
    batch = 200   # non-multiple of TILE_B=128 -> exercises padding + 2 grid tiles

    key = jax.random.PRNGKey(0)
    kx, kp = jax.random.split(key)
    x = jax.random.normal(kx, (batch, input_size), jnp.float32)
    weights, biases = _init_params(kp, input_size, hidden_sizes)

    ref = _reference(x, weights, biases)

    # f32 MXU-operand path (default; tight tolerance).
    out = jax.block_until_ready(option_pricing_nn(x, weights, biases))
    assert out.shape == (batch, 1), out.shape
    assert jnp.allclose(out, ref, atol=1e-5, rtol=1e-5)

    # bf16 MXU-operand path (recommended on v6e/v7x); f32 accumulation and
    # elementwise, so only a modest tolerance loosening is needed.
    out_bf16 = jax.block_until_ready(
        option_pricing_nn(x, weights, biases, compute_dtype=jnp.bfloat16))
    assert out_bf16.shape == (batch, 1), out_bf16.shape
    assert jnp.allclose(out_bf16, ref, atol=5e-2, rtol=5e-2)

    print("KERNEL_OK")
</pallas_src>

<mosaic_0001>
module attributes {stable_mosaic.version = 11 : i64} {
  func.func @_mlp_kernel(%arg0: i32, %arg1: memref<8x128xf32, #tpu.memory_space<vmem>>, %arg2: memref<32x8xf32, #tpu.memory_space<vmem>>, %arg3: memref<32x1xf32, #tpu.memory_space<vmem>>, %arg4: memref<32x32xf32, #tpu.memory_space<vmem>>, %arg5: memref<32x1xf32, #tpu.memory_space<vmem>>, %arg6: memref<32x1xf32, #tpu.memory_space<vmem>>, %arg7: memref<1x1xf32, #tpu.memory_space<vmem>>, %arg8: memref<1x128xf32, #tpu.memory_space<vmem>>) attributes {dimension_semantics = [#tpu.dimension_semantics<parallel>], iteration_bounds = array<i64: 2>, scalar_prefetch = 0 : i64, scratch_operands = 0 : i64, tpu.core_type = #tpu.core_type<tc>, window_params = [{transform_indices = @transform_0, window_bounds = array<i64: 8, 128>}, {pipeline_mode = #tpu.pipeline_mode<synchronous>, transform_indices = @transform_1, window_bounds = array<i64: 32, 8>}, {pipeline_mode = #tpu.pipeline_mode<synchronous>, transform_indices = @transform_2, window_bounds = array<i64: 32, 1>}, {pipeline_mode = #tpu.pipeline_mode<synchronous>, transform_indices = @transform_3, window_bounds = array<i64: 32, 32>}, {pipeline_mode = #tpu.pipeline_mode<synchronous>, transform_indices = @transform_4, window_bounds = array<i64: 32, 1>}, {pipeline_mode = #tpu.pipeline_mode<synchronous>, transform_indices = @transform_5, window_bounds = array<i64: 32, 1>}, {pipeline_mode = #tpu.pipeline_mode<synchronous>, transform_indices = @transform_6, window_bounds = array<i64: 1, 1>}, {transform_indices = @transform_7, window_bounds = array<i64: 1, 128>}]} {
    %c0 = arith.constant 0 : index
    %c0_0 = arith.constant 0 : index
    %0 = vector.load %arg1[%c0, %c0_0] : memref<8x128xf32, #tpu.memory_space<vmem>>, vector<8x128xf32>
    %c0_1 = arith.constant 0 : index
    %c0_2 = arith.constant 0 : index
    %1 = vector.load %arg2[%c0_1, %c0_2] : memref<32x8xf32, #tpu.memory_space<vmem>>, vector<32x8xf32>
    %cst = arith.constant dense<0.000000e+00> : vector<32x128xf32>
    %2 = tpu.matmul %1, %0, %cst {dimension_numbers = #tpu.dot_dimension_numbers<[1], [0], [0], [1], [0, 0, 1, 1], [], []>} : vector<32x8xf32>, vector<8x128xf32>, vector<32x128xf32> -> vector<32x128xf32>
    %c0_3 = arith.constant 0 : index
    %c0_4 = arith.constant 0 : index
    %3 = vector.load %arg3[%c0_3, %c0_4] : memref<32x1xf32, #tpu.memory_space<vmem>>, vector<32x1xf32>
    %4 = vector.broadcast %3 : vector<32x1xf32> to vector<32x128xf32>
    %5 = arith.addf %2, %4 : vector<32x128xf32>
    %cst_5 = arith.constant 0.000000e+00 : f32
    %6 = vector.broadcast %cst_5 : f32 to vector<32x128xf32>
    %7 = arith.maximumf %5, %6 : vector<32x128xf32>
    %c0_6 = arith.constant 0 : index
    %c0_7 = arith.constant 0 : index
    %8 = vector.load %arg4[%c0_6, %c0_7] : memref<32x32xf32, #tpu.memory_space<vmem>>, vector<32x32xf32>
    %cst_8 = arith.constant dense<0.000000e+00> : vector<32x128xf32>
    %9 = tpu.matmul %8, %7, %cst_8 {dimension_numbers = #tpu.dot_dimension_numbers<[1], [0], [0], [1], [0, 0, 1, 1], [], []>} : vector<32x32xf32>, vector<32x128xf32>, vector<32x128xf32> -> vector<32x128xf32>
    %c0_9 = arith.constant 0 : index
    %c0_10 = arith.constant 0 : index
    %10 = vector.load %arg5[%c0_9, %c0_10] : memref<32x1xf32, #tpu.memory_space<vmem>>, vector<32x1xf32>
    %11 = vector.broadcast %10 : vector<32x1xf32> to vector<32x128xf32>
    %12 = arith.addf %9, %11 : vector<32x128xf32>
    %cst_11 = arith.constant 0.000000e+00 : f32
    %13 = vector.broadcast %cst_11 : f32 to vector<32x128xf32>
    %14 = arith.maximumf %12, %13 : vector<32x128xf32>
    %c0_12 = arith.constant 0 : index
    %c0_13 = arith.constant 0 : index
    %15 = vector.load %arg6[%c0_12, %c0_13] : memref<32x1xf32, #tpu.memory_space<vmem>>, vector<32x1xf32>
    %16 = vector.broadcast %15 : vector<32x1xf32> to vector<32x128xf32>
    %17 = arith.mulf %14, %16 : vector<32x128xf32>
    %cst_14 = arith.constant dense<0.000000e+00> : vector<128xf32>
    %18 = vector.multi_reduction <add>, %17, %cst_14 [0] : vector<32x128xf32> to vector<128xf32>
    %19 = vector.shape_cast %18 : vector<128xf32> to vector<1x128xf32>
    %c0_15 = arith.constant 0 : index
    %c0_16 = arith.constant 0 : index
    %20 = vector.load %arg7[%c0_15, %c0_16] : memref<1x1xf32, #tpu.memory_space<vmem>>, vector<1x1xf32>
    %21 = vector.broadcast %20 : vector<1x1xf32> to vector<1x128xf32>
    %22 = arith.addf %19, %21 : vector<1x128xf32>
    %c0_17 = arith.constant 0 : index
    %c0_18 = arith.constant 0 : index
    %23 = vector.load %arg8[%c0_17, %c0_18] : memref<1x128xf32, #tpu.memory_space<vmem>>, vector<1x128xf32>
    tpu.vector_store %arg8[%c0_17, %c0_18], %22 {strides = array<i32>} : memref<1x128xf32, #tpu.memory_space<vmem>>, vector<1x128xf32>,
    return
  }
  func.func @transform_0(%arg0: i32) -> (i32, i32) {
    %c0_i32 = arith.constant 0 : i32
    %c0_i32_0 = arith.constant 0 : i32
    return %c0_i32, %arg0 : i32, i32
  }
  func.func @transform_1(%arg0: i32) -> (i32, i32) {
    %c0_i32 = arith.constant 0 : i32
    %c0_i32_0 = arith.constant 0 : i32
    %c0_i32_1 = arith.constant 0 : i32
    return %c0_i32, %c0_i32_0 : i32, i32
  }
  func.func @transform_2(%arg0: i32) -> (i32, i32) {
    %c0_i32 = arith.constant 0 : i32
    %c0_i32_0 = arith.constant 0 : i32
    %c0_i32_1 = arith.constant 0 : i32
    return %c0_i32, %c0_i32_0 : i32, i32
  }
  func.func @transform_3(%arg0: i32) -> (i32, i32) {
    %c0_i32 = arith.constant 0 : i32
    %c0_i32_0 = arith.constant 0 : i32
    %c0_i32_1 = arith.constant 0 : i32
    return %c0_i32, %c0_i32_0 : i32, i32
  }
  func.func @transform_4(%arg0: i32) -> (i32, i32) {
    %c0_i32 = arith.constant 0 : i32
    %c0_i32_0 = arith.constant 0 : i32
    %c0_i32_1 = arith.constant 0 : i32
    return %c0_i32, %c0_i32_0 : i32, i32
  }
  func.func @transform_5(%arg0: i32) -> (i32, i32) {
    %c0_i32 = arith.constant 0 : i32
    %c0_i32_0 = arith.constant 0 : i32
    %c0_i32_1 = arith.constant 0 : i32
    return %c0_i32, %c0_i32_0 : i32, i32
  }
  func.func @transform_6(%arg0: i32) -> (i32, i32) {
    %c0_i32 = arith.constant 0 : i32
    %c0_i32_0 = arith.constant 0 : i32
    %c0_i32_1 = arith.constant 0 : i32
    return %c0_i32, %c0_i32_0 : i32, i32
  }
  func.func @transform_7(%arg0: i32) -> (i32, i32) {
    %c0_i32 = arith.constant 0 : i32
    %c0_i32_0 = arith.constant 0 : i32
    return %c0_i32, %arg0 : i32, i32
  }
}

</mosaic_0001>

<llo_original>
// kernel: tpu_custom_call.1
$region0: #{tpu_custom_call.1}
  #allocation0 [shape = 'u32[]', space=smem, size = 0x4, offset = 0x4, fixed_abs, tag = 'smem constant byte address 0x4 - core index']
  #allocation1 [shape = 'u32[144,128]{1,0:T(1,128)}', space=vmem, size = 0x12000, scoped, tag = 'internal scratch']
  #allocation2 [shape = 'f32[1,1]{1,0:T(1,128)S(1)}', space=vmem, size = 0x200, scoped, tag = 'scoped memory for tpu_custom_call.1']
  %s0 = inlined_call_operand.vmem [shape: f32[8,256], index: 0, kind: input, shape index: {}]
  %s1 = inlined_call_operand.vmem [shape: f32[32,8], index: 1, kind: input, shape index: {}]
  %s2 = inlined_call_operand.vmem [shape: f32[32,1], index: 2, kind: input, shape index: {}]
  %s3 = inlined_call_operand.vmem [shape: f32[32,32], index: 3, kind: input, shape index: {}]
  %s4 = inlined_call_operand.vmem [shape: f32[32,1], index: 4, kind: input, shape index: {}]
  %s5 = inlined_call_operand.vmem [shape: f32[32,1], index: 5, kind: input, shape index: {}]
  %s6 = inlined_call_operand.<no memory space> [shape: f32[1,1], index: 6, kind: input, shape index: {}]
  %s7 = inlined_call_operand.hbm [shape: f32[1,256], index: 7, kind: output, shape index: {}]
  %s8 = sld [smem:[#allocation0]]
  $region61: #{tpu_custom_call.1} parent=0
    _
  %s10 = ssub.s32 1, %s8
  %s11 = scalar_select 0, %s10, %s8
  %v12 = vstv %s6
  %13 = vst [vmem:[#allocation2] sm:$0x1] %v12
  $region1: #{tpu_custom_call.1} parent=0
    #allocation3 [shape = 'u8[1024]{0}', space=vmem, size = 0x400, scoped, tag = 'output window, operand 0']
    #allocation4 [shape = 's32[2]{0}', space=sflag, size = 0x8, scoped, tag = 'scoped memory for tpu_custom_call.1']
    %14 = vsyncpa [#allocation4], 0
    %s15 = scalar_lea.sflag [#allocation4], 1
    %16 = vsyncpa %s15, 0
    loop: start=0, step=1, limit=4
    $region2: #{tpu_custom_call.1} parent=1 // loop_pre_header
      _
    $region3: #{tpu_custom_call.1} parent=1 // loop_header
      %s18 = sphi 0, %s22
      %p19 = scmp.ge.s32.totalorder %s18, 4
      %s28 = sphi 0, %s30
      %s31 = sphi 0, %s28
      %s32 = sphi 0, %s31
      %s48 = sphi 0, %s32
      %s52 = sphi 0, %s52
      %s54 = sphi 0, %s52
      %s55 = sphi 0, %s54
      %s69 = sphi 0, %s55
      %s73 = sphi 0, %s73
      %s75 = sphi 0, %s73
      %s76 = sphi 0, %s75
      %s90 = sphi 0, %s76
      %s94 = sphi 0, %s94
      %s96 = sphi 0, %s94
      %s97 = sphi 0, %s96
      %s111 = sphi 0, %s97
      %s115 = sphi 0, %s115
      %s117 = sphi 0, %s115
      %s118 = sphi 0, %s117
      %s132 = sphi 0, %s118
      %s136 = sphi 0, %s136
      %s138 = sphi 0, %s136
      %s139 = sphi 0, %s138
      %s153 = sphi 0, %s139
      %s157 = sphi 0, %s157
      %s159 = sphi 0, %s157
      %s160 = sphi 0, %s159
      %s174 = sphi 0, %s160
      %s180 = sphi 0, %s182
      %s183 = sphi 0, %s180
      %s184 = sphi 0, %s183
      %s200 = sphi 0, %s184
    $region4: #{tpu_custom_call.1} parent=1 // loop_header_branch
      %21 = sbr.rel (%p19) target = $region8
    $region5: #{tpu_custom_call.1} parent=1 // loop_body
      %s23 = ssub.s32 %s18, 1
      %s24 = ssub.s32 %s18, 2
      %s25 = sadd.s32 %s18, 1
      %s26 = ssub.s32 %s18, %s25
      %p27 = scmp.eq.s32.totalorder %s26, 0
      %s29 = sadd.s32 %s28, 1
      %s30 = scalar_select %p27, %s28, %s29
      %p33 = pneg %p27
      %p34 = scmp.eq.s32.totalorder %s18, 1
      %p35 = por %p33, %p34
      %p36 = scmp.ne.s32.totalorder %s28, %s31
      %p37 = scmp.eq.s32.totalorder %s18, 0
      %p38 = por %p36, %p37
      %p39 = scmp.ne.s32.totalorder %s28, %s31
      %p40 = scmp.eq.s32.totalorder %s23, 1
      %p41 = por %p39, %p40
      %p42 = scmp.ne.s32.totalorder %s31, %s32
      %p43 = scmp.eq.s32.totalorder %s23, 0
      %p44 = por %p42, %p43
      %p45 = scmp.ne.s32.totalorder %s31, %s32
      %p46 = scmp.eq.s32.totalorder %s24, 1
      %p47 = por %p45, %p46
      %p49 = scmp.ne.s32.totalorder %s32, %s48
      %p50 = scmp.eq.s32.totalorder %s24, 0
      %p51 = por %p49, %p50
      %s53 = sadd.s32 %s52, 1
      %p56 = scmp.eq.s32.totalorder %s18, 1
      %p57 = scmp.ne.s32.totalorder %s52, %s54
      %p58 = scmp.eq.s32.totalorder %s18, 0
      %p59 = por %p57, %p58
      %p60 = scmp.ne.s32.totalorder %s52, %s54
      %p61 = scmp.eq.s32.totalorder %s23, 1
      %p62 = por %p60, %p61
      %p63 = scmp.ne.s32.totalorder %s54, %s55
      %p64 = scmp.eq.s32.totalorder %s23, 0
      %p65 = por %p63, %p64
      %p66 = scmp.ne.s32.totalorder %s54, %s55
      %p67 = scmp.eq.s32.totalorder %s24, 1
      %p68 = por %p66, %p67
      %p70 = scmp.ne.s32.totalorder %s55, %s69
      %p71 = scmp.eq.s32.totalorder %s24, 0
      %p72 = por %p70, %p71
      %s74 = sadd.s32 %s73, 1
      %p77 = scmp.eq.s32.totalorder %s18, 1
      %p78 = scmp.ne.s32.totalorder %s73, %s75
      %p79 = scmp.eq.s32.totalorder %s18, 0
      %p80 = por %p78, %p79
      %p81 = scmp.ne.s32.totalorder %s73, %s75
      %p82 = scmp.eq.s32.totalorder %s23, 1
      %p83 = por %p81, %p82
      %p84 = scmp.ne.s32.totalorder %s75, %s76
      %p85 = scmp.eq.s32.totalorder %s23, 0
      %p86 = por %p84, %p85
      %p87 = scmp.ne.s32.totalorder %s75, %s76
      %p88 = scmp.eq.s32.totalorder %s24, 1
      %p89 = por %p87, %p88
      %p91 = scmp.ne.s32.totalorder %s76, %s90
      %p92 = scmp.eq.s32.totalorder %s24, 0
      %p93 = por %p91, %p92
      %s95 = sadd.s32 %s94, 1
      %p98 = scmp.eq.s32.totalorder %s18, 1
      %p99 = scmp.ne.s32.totalorder %s94, %s96
      %p100 = scmp.eq.s32.totalorder %s18, 0
      %p101 = por %p99, %p100
      %p102 = scmp.ne.s32.totalorder %s94, %s96
      %p103 = scmp.eq.s32.totalorder %s23, 1
      %p104 = por %p102, %p103
      %p105 = scmp.ne.s32.totalorder %s96, %s97
      %p106 = scmp.eq.s32.totalorder %s23, 0
      %p107 = por %p105, %p106
      %p108 = scmp.ne.s32.totalorder %s96, %s97
      %p109 = scmp.eq.s32.totalorder %s24, 1
      %p110 = por %p108, %p109
      %p112 = scmp.ne.s32.totalorder %s97, %s111
      %p113 = scmp.eq.s32.totalorder %s24, 0
      %p114 = por %p112, %p113
      %s116 = sadd.s32 %s115, 1
      %p119 = scmp.eq.s32.totalorder %s18, 1
      %p120 = scmp.ne.s32.totalorder %s115, %s117
      %p121 = scmp.eq.s32.totalorder %s18, 0
      %p122 = por %p120, %p121
      %p123 = scmp.ne.s32.totalorder %s115, %s117
      %p124 = scmp.eq.s32.totalorder %s23, 1
      %p125 = por %p123, %p124
      %p126 = scmp.ne.s32.totalorder %s117, %s118
      %p127 = scmp.eq.s32.totalorder %s23, 0
      %p128 = por %p126, %p127
      %p129 = scmp.ne.s32.totalorder %s117, %s118
      %p130 = scmp.eq.s32.totalorder %s24, 1
      %p131 = por %p129, %p130
      %p133 = scmp.ne.s32.totalorder %s118, %s132
      %p134 = scmp.eq.s32.totalorder %s24, 0
      %p135 = por %p133, %p134
      %s137 = sadd.s32 %s136, 1
      %p140 = scmp.eq.s32.totalorder %s18, 1
      %p141 = scmp.ne.s32.totalorder %s136, %s138
      %p142 = scmp.eq.s32.totalorder %s18, 0
      %p143 = por %p141, %p142
      %p144 = scmp.ne.s32.totalorder %s136, %s138
      %p145 = scmp.eq.s32.totalorder %s23, 1
      %p146 = por %p144, %p145
      %p147 = scmp.ne.s32.totalorder %s138, %s139
      %p148 = scmp.eq.s32.totalorder %s23, 0
      %p149 = por %p147, %p148
      %p150 = scmp.ne.s32.totalorder %s138, %s139
      %p151 = scmp.eq.s32.totalorder %s24, 1
      %p152 = por %p150, %p151
      %p154 = scmp.ne.s32.totalorder %s139, %s153
      %p155 = scmp.eq.s32.totalorder %s24, 0
      %p156 = por %p154, %p155
      %s158 = sadd.s32 %s157, 1
      %p161 = scmp.eq.s32.totalorder %s18, 1
      %p162 = scmp.ne.s32.totalorder %s157, %s159
      %p163 = scmp.eq.s32.totalorder %s18, 0
      %p164 = por %p162, %p163
      %p165 = scmp.ne.s32.totalorder %s157, %s159
      %p166 = scmp.eq.s32.totalorder %s23, 1
      %p167 = por %p165, %p166
      %p168 = scmp.ne.s32.totalorder %s159, %s160
      %p169 = scmp.eq.s32.totalorder %s23, 0
      %p170 = por %p168, %p169
      %p171 = scmp.ne.s32.totalorder %s159, %s160
      %p172 = scmp.eq.s32.totalorder %s24, 1
      %p173 = por %p171, %p172
      %p175 = scmp.ne.s32.totalorder %s160, %s174
      %p176 = scmp.eq.s32.totalorder %s24, 0
      %p177 = por %p175, %p176
      %s178 = ssub.s32 %s18, %s25
      %p179 = scmp.eq.s32.totalorder %s178, 0
      %s181 = sadd.s32 %s180, 1
      %s182 = scalar_select %p179, %s180, %s181
      %p185 = pneg %p179
      %p186 = scmp.eq.s32.totalorder %s18, 1
      %p187 = por %p185, %p186
      %p188 = scmp.ne.s32.totalorder %s180, %s183
      %p189 = scmp.eq.s32.totalorder %s18, 0
      %p190 = por %p188, %p189
      %p191 = scmp.ne.s32.totalorder %s180, %s183
      %p192 = scmp.eq.s32.totalorder %s23, 1
      %p193 = por %p191, %p192
      %p194 = scmp.ne.s32.totalorder %s183, %s184
      %p195 = scmp.eq.s32.totalorder %s23, 0
      %p196 = por %p194, %p195
      %p197 = scmp.ne.s32.totalorder %s183, %s184
      %p198 = scmp.eq.s32.totalorder %s24, 1
      %p199 = por %p197, %p198
      %p201 = scmp.ne.s32.totalorder %s184, %s200
      %p202 = scmp.eq.s32.totalorder %s24, 0
      %p203 = por %p201, %p202
      %p204 = scmp.le.s32.totalorder 1, %s18
      %p205 = scmp.lt.s32.totalorder %s18, 3
      %p206 = pnand %p204, %p205
      %p207 = pneg %p206
      // Predicated region
      $region9: #{tpu_custom_call.1} parent=5 // pred_check
        _
      $region10: #{tpu_custom_call.1} parent=5 // pred_check_branch
        %209 = sbr.rel (%p206) target = $region12
      $region11: #{tpu_custom_call.1} parent=5 // pred_region
        %s210 = ssub.s32 %s18, 1
        // Predicated region
        $region13: #{tpu_custom_call.1} parent=11 // pred_check
          %p211 = pneg %p65
        $region14: #{tpu_custom_call.1} parent=11 // pred_check_branch
          %213 = sbr.rel (%p211) target = $region16
        $region15: #{tpu_custom_call.1} parent=11 // pred_region
          _
        $region16: #{tpu_custom_call.1} parent=11 // pred_fallthru
          _
        // Predicated region
        $region17: #{tpu_custom_call.1} parent=11 // pred_check
          %p214 = pneg %p86
        $region18: #{tpu_custom_call.1} parent=11 // pred_check_branch
          %216 = sbr.rel (%p214) target = $region20
        $region19: #{tpu_custom_call.1} parent=11 // pred_region
          _
        $region20: #{tpu_custom_call.1} parent=11 // pred_fallthru
          _
        // Predicated region
        $region21: #{tpu_custom_call.1} parent=11 // pred_check
          %p217 = pneg %p107
        $region22: #{tpu_custom_call.1} parent=11 // pred_check_branch
          %219 = sbr.rel (%p217) target = $region24
        $region23: #{tpu_custom_call.1} parent=11 // pred_region
          _
        $region24: #{tpu_custom_call.1} parent=11 // pred_fallthru
          _
        // Predicated region
        $region25: #{tpu_custom_call.1} parent=11 // pred_check
          %p220 = pneg %p128
        $region26: #{tpu_custom_call.1} parent=11 // pred_check_branch
          %222 = sbr.rel (%p220) target = $region28
        $region27: #{tpu_custom_call.1} parent=11 // pred_region
          _
        $region28: #{tpu_custom_call.1} parent=11 // pred_fallthru
          _
        // Predicated region
        $region29: #{tpu_custom_call.1} parent=11 // pred_check
          %p223 = pneg %p149
        $region30: #{tpu_custom_call.1} parent=11 // pred_check_branch
          %225 = sbr.rel (%p223) target = $region32
        $region31: #{tpu_custom_call.1} parent=11 // pred_region
          _
        $region32: #{tpu_custom_call.1} parent=11 // pred_fallthru
          _
        // Predicated region
        $region33: #{tpu_custom_call.1} parent=11 // pred_check
          %p226 = pneg %p170
        $region34: #{tpu_custom_call.1} parent=11 // pred_check_branch
          %228 = sbr.rel (%p226) target = $region36
        $region35: #{tpu_custom_call.1} parent=11 // pred_region
          _
        $region36: #{tpu_custom_call.1} parent=11 // pred_fallthru
          _
      $region12: #{tpu_custom_call.1} parent=5 // pred_fallthru
        _
      %p229 = scmp.lt.s32.totalorder %s18, 2
      // Predicated region
      $region37: #{tpu_custom_call.1} parent=5 // pred_check
        %p230 = pneg %p229
      $region38: #{tpu_custom_call.1} parent=5 // pred_check_branch
        %232 = sbr.rel (%p230) target = $region40
      $region39: #{tpu_custom_call.1} parent=5 // pred_region
        // Predicated region
        $region41: #{tpu_custom_call.1} parent=39 // pred_check
          %p233 = pneg %p38
        $region42: #{tpu_custom_call.1} parent=39 // pred_check_branch
          %235 = sbr.rel (%p233) target = $region44
        $region43: #{tpu_custom_call.1} parent=39 // pred_region
          %p236 = scmp.lt.s32.totalorder %s18, 1
          %s237 = scalar_select %p236, %s18, 1
          %s238 = smul.addr %s237, 8
          %s239 = scalar_lea.vmem %s0, %s238
        $region44: #{tpu_custom_call.1} parent=39 // pred_fallthru
          _
      $region40: #{tpu_custom_call.1} parent=5 // pred_fallthru
        _
      %p240 = scmp.le.s32.totalorder 1, %s18
      %p241 = scmp.lt.s32.totalorder %s18, 3
      %p242 = pnand %p240, %p241
      %p243 = pneg %p242
      // Predicated region
      $region45: #{tpu_custom_call.1} parent=5 // pred_check
        _
      $region46: #{tpu_custom_call.1} parent=5 // pred_check_branch
        %245 = sbr.rel (%p242) target = $region48
      $region47: #{tpu_custom_call.1} parent=5 // pred_region
        %s246 = ssub.s32 %s18, 1
        %p247 = scmp.lt.s32.totalorder %s23, 1
        %s248 = scalar_select %p247, %s23, 1
        %s249 = smul.addr %s248, 8
        %s250 = scalar_lea.vmem %s0, %s249
        %p251 = pneg %p44
        %p252 = pneg %p41
        %p253 = pneg %p65
        %p254 = pneg %p62
        %p255 = pneg %p86
        %p256 = pneg %p83
        %p257 = pneg %p107
        %p258 = pneg %p104
        %p259 = pneg %p128
        %p260 = pneg %p125
        %p261 = pneg %p149
        %p262 = pneg %p146
        %p263 = pneg %p170
        %p264 = pneg %p167
        %p265 = pneg %p196
        %p266 = pneg %p193
        %s267 = sand.u32 %s183, 1
        %s268 = scalar_lea.sflag [#allocation4], %s267
        %s269 = sand.u32 %s183, 1
        %s270 = scalar_lea.vmem [#allocation3], %s269
        %p271 = scmp.lt.s32.totalorder %s23, 1
        %s272 = scalar_select %p271, %s23, 1
        %s273 = smul.addr %s272, 8
        %s274 = scalar_lea.vmem %s0, %s273
        %v275 = vld [vmem:[%s274] sm:$0xff]
        %v276 = vld [vmem:[%s1] sm:$0xff]
        %v277 = vld [vmem:[%s1 + $0x8] sm:$0xff]
        %v278 = vld [vmem:[%s1 + $0x10] sm:$0xff]
        %v279 = vld [vmem:[%s1 + $0x18] sm:$0xff]
        %v280 = vld [vmem:[%s2] sm:$0xff]
        %v281 = vld [vmem:[%s2 + $0x8] sm:$0xff]
        %v282 = vld [vmem:[%s2 + $0x10] sm:$0xff]
        %v283 = vld [vmem:[%s2 + $0x18] sm:$0xff]
        %285 = vset.pattern.permute.xlu0 0
        %286 = vperm.xlu0 %285, %v280
        %v287 = vpop.permute.xlu0 %286
        %290 = vset.pattern.permute.xlu0 0
        %291 = vperm.xlu0 %290, %v281
        %v292 = vpop.permute.xlu0 %291
        %295 = vset.pattern.permute.xlu0 0
        %296 = vperm.xlu0 %295, %v282
        %v297 = vpop.permute.xlu0 %296
        %300 = vset.pattern.permute.xlu0 0
        %301 = vperm.xlu0 %300, %v283
        %v302 = vpop.permute.xlu0 %301
        %vm304 = vcmask 64512
        %v306 = vsel %vm304, %v276, 0
        %v309 = vsel %vm304, %v277, 0
        %v312 = vsel %vm304, %v278, 0
        %v315 = vsel %vm304, %v279, 0
        %317 = vmatprep.subr.mxu0 0.0
        %318 = vmatpush1.msra.mxu0 %v275
        %319 = vmatprep.subr.mxu0 0.0
        %320 = vmatpush1.msra.mxu0 0.0
        %321 = vmatprep.subr.mxu0 0.0
        %322 = vmatpush1.msra.mxu0 0.0
        %323 = vmatprep.subr.mxu0 0.0
        %324 = vmatpush1.msra.mxu0 0.0
        %325 = vmatprep.subr.mxu0 0.0
        %326 = vmatpush1.msra.mxu0 0.0
        %327 = vmatprep.subr.mxu0 0.0
        %328 = vmatpush1.msra.mxu0 0.0
        %329 = vmatprep.subr.mxu0 0.0
        %330 = vmatpush1.msra.mxu0 0.0
        %331 = vmatprep.subr.mxu0 0.0
        %332 = vmatpush1.msra.mxu0 0.0
        %333 = vmatprep.subr.mxu0 0.0
        %334 = vmatpush1.msra.mxu0 0.0
        %335 = vmatprep.subr.mxu0 0.0
        %336 = vmatpush1.msra.mxu0 0.0
        %337 = vmatprep.subr.mxu0 0.0
        %338 = vmatpush1.msra.mxu0 0.0
        %339 = vmatprep.subr.mxu0 0.0
        %340 = vmatpush1.msra.mxu0 0.0
        %341 = vmatprep.subr.mxu0 0.0
        %342 = vmatpush1.msra.mxu0 0.0
        %343 = vmatprep.subr.mxu0 0.0
        %344 = vmatpush1.msra.mxu0 0.0
        %345 = vmatprep.subr.mxu0 0.0
        %346 = vmatpush1.msra.mxu0 0.0
        %347 = vmatprep.subr.mxu0 0.0
        %348 = vmatpush1.msra.mxu0 0.0
        %349 = vmatprep.subr.mxu0 0.0
        %350 = vmatpush1.msra.mxu0 0.0
        %351 = vmatprep.subr.mxu0 0.0
        %352 = vmatpush1.msra.mxu0 0.0
        %353 = vmatprep.subr.mxu0 0.0
        %354 = vmatpush1.msra.mxu0 0.0
        %355 = vmatprep.subr.mxu0 0.0
        %356 = vmatpush1.msra.mxu0 0.0
        %357 = vmatprep.subr.mxu0 0.0
        %358 = vmatpush1.msra.mxu0 0.0
        %359 = vmatprep.subr.mxu0 0.0
        %360 = vmatpush1.msra.mxu0 0.0
        %361 = vmatprep.subr.mxu0 0.0
        %362 = vmatpush1.msra.mxu0 0.0
        %363 = vmatprep.subr.mxu0 0.0
        %364 = vmatpush1.msra.mxu0 0.0
        %365 = vmatprep.subr.mxu0 0.0
        %366 = vmatpush1.msra.mxu0 0.0
        %367 = vmatprep.subr.mxu0 0.0
        %368 = vmatpush1.msra.mxu0 0.0
        %369 = vmatprep.subr.mxu0 0.0
        %370 = vmatpush1.msra.mxu0 0.0
        %371 = vmatprep.subr.mxu0 0.0
        %372 = vmatpush1.msra.mxu0 0.0
        %373 = vmatprep.subr.mxu0 0.0
        %374 = vmatpush1.msra.mxu0 0.0
        %375 = vmatprep.subr.mxu0 0.0
        %376 = vmatpush1.msra.mxu0 0.0
        %377 = vmatprep.subr.mxu0 0.0
        %378 = vmatpush1.msra.mxu0 0.0
        %379 = vmatprep.subr.mxu0 0.0
        %380 = vmatpush1.msra.mxu0 0.0
        %381 = vmatprep.mubr.f32.mxu0 0.0
        %382 = vmatmul.mubr.f32.gmra.mrb[0].mxu0 %v306
        %v383 = vpop.f32.mrb[0].mxu0
        %v384 = vadd.f32 %v287, %v383
        %v385 = vpop.f32.mrb[0].mxu0
        %386 = vmatprep.mubr.f32.mxu0 0.0
        %387 = vmatmul.mubr.f32.gmra.mrb[0].mxu0 %v309
        %v388 = vpop.f32.mrb[0].mxu0
        %v389 = vadd.f32 %v292, %v388
        %v390 = vpop.f32.mrb[0].mxu0
        %391 = vmatprep.mubr.f32.mxu0 0.0
        %392 = vmatmul.mubr.f32.gmra.mrb[0].mxu0 %v312
        %v393 = vpop.f32.mrb[0].mxu0
        %v394 = vadd.f32 %v297, %v393
        %v395 = vpop.f32.mrb[0].mxu0
        %396 = vmatprep.mubr.f32.mxu0 0.0
        %397 = vmatmul.mubr.f32.gmra.mrb[0].mxu0 %v315
        %v398 = vpop.f32.mrb[0].mxu0
        %v399 = vadd.f32 %v302, %v398
        %v400 = vpop.f32.mrb[0].mxu0
        %401 = vdwg.mxu0
        %v402 = vmax.f32 %v384, 0.0
        %v403 = vmax.f32 %v389, 0.0
        %v404 = vmax.f32 %v394, 0.0
        %v405 = vmax.f32 %v399, 0.0
        %v406 = vld [vmem:[%s3] sm:$0xff]
        %v407 = vld [vmem:[%s3 + $0x8] sm:$0xff]
        %v408 = vld [vmem:[%s3 + $0x10] sm:$0xff]
        %v409 = vld [vmem:[%s3 + $0x18] sm:$0xff]
        %v410 = vld [vmem:[%s4] sm:$0xff]
        %v411 = vld [vmem:[%s4 + $0x8] sm:$0xff]
        %v412 = vld [vmem:[%s4 + $0x10] sm:$0xff]
        %v413 = vld [vmem:[%s4 + $0x18] sm:$0xff]
        %415 = vset.pattern.permute.xlu0 0
        %416 = vperm.xlu0 %415, %v410
        %v417 = vpop.permute.xlu0 %416
        %420 = vset.pattern.permute.xlu0 0
        %421 = vperm.xlu0 %420, %v411
        %v422 = vpop.permute.xlu0 %421
        %425 = vset.pattern.permute.xlu0 0
        %426 = vperm.xlu0 %425, %v412
        %v427 = vpop.permute.xlu0 %426
        %430 = vset.pattern.permute.xlu0 0
        %431 = vperm.xlu0 %430, %v413
        %v432 = vpop.permute.xlu0 %431
        %vm434 = vcmask 261120
        %v436 = vsel %vm434, %v406, 0
        %v439 = vsel %vm434, %v407, 0
        %v442 = vsel %vm434, %v408, 0
        %v445 = vsel %vm434, %v409, 0
        %447 = vmatprep.subr.mxu0 0.0
        %448 = vmatpush1.msra.mxu0 %v402
        %449 = vmatprep.subr.mxu0 0.0
        %450 = vmatpush1.msra.mxu0 %v403
        %451 = vmatprep.subr.mxu0 0.0
        %452 = vmatpush1.msra.mxu0 %v404
        %453 = vmatprep.subr.mxu0 0.0
        %454 = vmatpush1.msra.mxu0 %v405
        %455 = vmatprep.subr.mxu0 0.0
        %456 = vmatpush1.msra.mxu0 0.0
        %457 = vmatprep.subr.mxu0 0.0
        %458 = vmatpush1.msra.mxu0 0.0
        %459 = vmatprep.subr.mxu0 0.0
        %460 = vmatpush1.msra.mxu0 0.0
        %461 = vmatprep.subr.mxu0 0.0
        %462 = vmatpush1.msra.mxu0 0.0
        %463 = vmatprep.subr.mxu0 0.0
        %464 = vmatpush1.msra.mxu0 0.0
        %465 = vmatprep.subr.mxu0 0.0
        %466 = vmatpush1.msra.mxu0 0.0
        %467 = vmatprep.subr.mxu0 0.0
        %468 = vmatpush1.msra.mxu0 0.0
        %469 = vmatprep.subr.mxu0 0.0
        %470 = vmatpush1.msra.mxu0 0.0
        %471 = vmatprep.subr.mxu0 0.0
        %472 = vmatpush1.msra.mxu0 0.0
        %473 = vmatprep.subr.mxu0 0.0
        %474 = vmatpush1.msra.mxu0 0.0
        %475 = vmatprep.subr.mxu0 0.0
        %476 = vmatpush1.msra.mxu0 0.0
        %477 = vmatprep.subr.mxu0 0.0
        %478 = vmatpush1.msra.mxu0 0.0
        %479 = vmatprep.subr.mxu0 0.0
        %480 = vmatpush1.msra.mxu0 0.0
        %481 = vmatprep.subr.mxu0 0.0
        %482 = vmatpush1.msra.mxu0 0.0
        %483 = vmatprep.subr.mxu0 0.0
        %484 = vmatpush1.msra.mxu0 0.0
        %485 = vmatprep.subr.mxu0 0.0
        %486 = vmatpush1.msra.mxu0 0.0
        %487 = vmatprep.subr.mxu0 0.0
        %488 = vmatpush1.msra.mxu0 0.0
        %489 = vmatprep.subr.mxu0 0.0
        %490 = vmatpush1.msra.mxu0 0.0
        %491 = vmatprep.subr.mxu0 0.0
        %492 = vmatpush1.msra.mxu0 0.0
        %493 = vmatprep.subr.mxu0 0.0
        %494 = vmatpush1.msra.mxu0 0.0
        %495 = vmatprep.subr.mxu0 0.0
        %496 = vmatpush1.msra.mxu0 0.0
        %497 = vmatprep.subr.mxu0 0.0
        %498 = vmatpush1.msra.mxu0 0.0
        %499 = vmatprep.subr.mxu0 0.0
        %500 = vmatpush1.msra.mxu0 0.0
        %501 = vmatprep.subr.mxu0 0.0
        %502 = vmatpush1.msra.mxu0 0.0
        %503 = vmatprep.subr.mxu0 0.0
        %504 = vmatpush1.msra.mxu0 0.0
        %505 = vmatprep.subr.mxu0 0.0
        %506 = vmatpush1.msra.mxu0 0.0
        %507 = vmatprep.subr.mxu0 0.0
        %508 = vmatpush1.msra.mxu0 0.0
        %509 = vmatprep.subr.mxu0 0.0
        %510 = vmatpush1.msra.mxu0 0.0
        %511 = vmatprep.mubr.f32.mxu0 0.0
        %512 = vmatmul.mubr.f32.gmra.mrb[0].mxu0 %v436
        %v513 = vpop.f32.mrb[0].mxu0
        %v514 = vadd.f32 %v417, %v513
        %v515 = vpop.f32.mrb[0].mxu0
        %516 = vmatprep.mubr.f32.mxu0 0.0
        %517 = vmatmul.mubr.f32.gmra.mrb[0].mxu0 %v439
        %v518 = vpop.f32.mrb[0].mxu0
        %v519 = vadd.f32 %v422, %v518
        %v520 = vpop.f32.mrb[0].mxu0
        %521 = vmatprep.mubr.f32.mxu0 0.0
        %522 = vmatmul.mubr.f32.gmra.mrb[0].mxu0 %v442
        %v523 = vpop.f32.mrb[0].mxu0
        %v524 = vadd.f32 %v427, %v523
        %v525 = vpop.f32.mrb[0].mxu0
        %526 = vmatprep.mubr.f32.mxu0 0.0
        %527 = vmatmul.mubr.f32.gmra.mrb[0].mxu0 %v445
        %v528 = vpop.f32.mrb[0].mxu0
        %v529 = vadd.f32 %v432, %v528
        %v530 = vpop.f32.mrb[0].mxu0
        %531 = vdwg.mxu0
        %v532 = vmax.f32 %v514, 0.0
        %v533 = vmax.f32 %v519, 0.0
        %v534 = vmax.f32 %v524, 0.0
        %v535 = vmax.f32 %v529, 0.0
        %v536 = vld [vmem:[%s5] sm:$0xff]
        %v537 = vld [vmem:[%s5 + $0x8] sm:$0xff]
        %v538 = vld [vmem:[%s5 + $0x10] sm:$0xff]
        %v539 = vld [vmem:[%s5 + $0x18] sm:$0xff]
        %541 = vset.pattern.permute.xlu0 0
        %542 = vperm.xlu0 %541, %v536
        %v543 = vpop.permute.xlu0 %542
        %546 = vset.pattern.permute.xlu0 0
        %547 = vperm.xlu0 %546, %v537
        %v548 = vpop.permute.xlu0 %547
        %551 = vset.pattern.permute.xlu0 0
        %552 = vperm.xlu0 %551, %v538
        %v553 = vpop.permute.xlu0 %552
        %556 = vset.pattern.permute.xlu0 0
        %557 = vperm.xlu0 %556, %v539
        %v558 = vpop.permute.xlu0 %557
        %v560 = vmul.f32 %v532, %v543
        %v561 = vmul.f32 %v533, %v548
        %v562 = vmul.f32 %v534, %v553
        %v563 = vmul.f32 %v535, %v558
        %v564 = vadd.f32 %v560, %v561
        %v565 = vadd.f32 %v564, %v562
        %v566 = vadd.f32 %v565, %v563
        %v567 = vrot.slane %v566, 4
        %v568 = vadd.f32 %v566, %v567
        %v569 = vrot.slane %v568, 2
        %v570 = vadd.f32 %v568, %v569
        %v571 = vrot.slane %v570, 1
        %v572 = vadd.f32 %v570, %v571
        %v573 = vld [vmem:[#allocation2] sm:$0x1]
        %575 = vset.pattern.permute.xlu0 0
        %576 = vperm.xlu0 %575, %v573
        %v577 = vpop.permute.xlu0 %576
        %v579 = vlaneseq
        %v580 = vshrl.u32 %v579, 7
        %v581 = vsub.s32 0, %v580
        %v582 = vrot.slane %v577, %v581
        %v583 = vadd.f32 %v572, %v582
        %584 = vst [vmem:[%s270] sm:$0x1] %v583
        %s585 = sand.u32 %s183, 1
        %s586 = scalar_lea.sflag [#allocation4], %s585
        %s587 = sand.u32 %s183, 1
        %s588 = scalar_lea.vmem [#allocation3], %s587
        // Predicated region
        $region49: #{tpu_custom_call.1} parent=47 // pred_check
          %p589 = pneg %p193
        $region50: #{tpu_custom_call.1} parent=47 // pred_check_branch
          %591 = sbr.rel (%p589) target = $region52
        $region51: #{tpu_custom_call.1} parent=47 // pred_region
          %s593 = ssub.s32 16, 16
          %594 = vsyncadd %s586, %s593
          %s595 = smul.addr %s23, 16
          %s596 = scalar_lea.hbm %s7, %s595
          %s598 = sshll.u32 %s588, 4
          %s599 = int_to_ptr.vmem [resolvable:$true] %s598
          %601 = dma.vmem_to_hbm [thread:$0]  %s599, 16, %s596, %s586
        $region52: #{tpu_custom_call.1} parent=47 // pred_fallthru
          _
      $region48: #{tpu_custom_call.1} parent=5 // pred_fallthru
        _
      %p602 = scmp.le.s32.totalorder 2, %s18
      // Predicated region
      $region53: #{tpu_custom_call.1} parent=5 // pred_check
        %p603 = pneg %p602
      $region54: #{tpu_custom_call.1} parent=5 // pred_check_branch
        %605 = sbr.rel (%p603) target = $region56
      $region55: #{tpu_custom_call.1} parent=5 // pred_region
        %s606 = ssub.s32 %s18, 2
        // Predicated region
        $region57: #{tpu_custom_call.1} parent=55 // pred_check
          %p607 = pneg %p199
        $region58: #{tpu_custom_call.1} parent=55 // pred_check_branch
          %609 = sbr.rel (%p607) target = $region60
        $region59: #{tpu_custom_call.1} parent=55 // pred_region
          %s610 = sand.u32 %s184, 1
          %s611 = scalar_lea.sflag [#allocation4], %s610
          %s612 = sand.u32 %s184, 1
          %s613 = scalar_lea.vmem [#allocation3], %s612
          %614 = dma.done %s611, 16
        $region60: #{tpu_custom_call.1} parent=55 // pred_fallthru
          _
      $region56: #{tpu_custom_call.1} parent=5 // pred_fallthru
        _
    $region6: #{tpu_custom_call.1} parent=1 // loop_footer
      %s22 = sadd.s32 1, %s18
    $region7: #{tpu_custom_call.1} parent=1 // loop_footer_branch
      %17 = sbr.rel target = $region3
    $region8: #{tpu_custom_call.1} parent=1 // loop_exit
      _
    %615 = vsyncpa [#allocation4], 1
    %s616 = scalar_lea.sflag [#allocation4], 1
    %617 = vsyncpa %s616, 1

</llo_original>
